<compile_context>
chip_gen: v6e
topology: v6e:2x2x1
jax: 0.10.0
libtpu: 0.0.40
codegen_flags: <defaults>
</compile_context>

<pallas_src>
import math

import jax
import jax.numpy as jnp
from jax.experimental import pallas as pl
from jax.experimental.pallas import tpu as pltpu


_TARGET_BLOCK_BYTES = 2 * 1024 * 1024     # ~2 MiB per input block
_MAX_BLOCK_BYTES = 8 * 1024 * 1024        # hard cap per block
_VMEM_LIMIT_BYTES = 32 * 1024 * 1024      # safe on v5e / v6e / v7x


def _pick_tile(dim, unit, want):
    """Largest divisor of `dim` that is a multiple of `unit` and <= want.

    Falls back to the full dim (always a legal Pallas block extent) when no
    such divisor exists (dim < unit, or no unit-aligned divisor).
    """
    want = max(int(want), unit)
    limit = min(dim, want)
    # Enumerate divisors of dim (O(sqrt(dim)) at trace time).
    divisors = []
    d = 1
    while d * d <= dim:
        if dim % d == 0:
            divisors.append(d)
            divisors.append(dim // d)
        d += 1
    best = None
    for v in sorted(divisors):
        if v <= limit and v % unit == 0:
            best = v
    return best if best is not None else dim


def _swap13_kernel(x_ref, o_ref):
    # x: (1, a_blk, M, b_blk[, T]) -> o: (1, b_blk, M, a_blk[, T])
    x = x_ref[...]
    perm = (0, 3, 2, 1) if x.ndim == 4 else (0, 3, 2, 1, 4)
    o_ref[...] = jnp.transpose(x, perm)


def _swap13_merge_kernel(x_ref, o_ref):
    # x: (1, a_blk, M, b_blk, T) -> o: (1, b_blk, M, a_blk*T)   (lane-dense)
    y = jnp.transpose(x_ref[...], (0, 3, 2, 1, 4))
    o_ref[...] = y.reshape(o_ref.shape)


def _pallas_swap(kernel, x_c, out_struct, grid, in_spec, out_spec, nbytes):
    return pl.pallas_call(
        kernel,
        out_shape=out_struct,
        grid=grid,
        in_specs=[in_spec],
        out_specs=out_spec,
        compiler_params=pltpu.CompilerParams(
            dimension_semantics=("parallel",) * len(grid),
            vmem_limit_bytes=_VMEM_LIMIT_BYTES,
        ),
        cost_estimate=pl.CostEstimate(
            flops=0, transcendentals=0, bytes_accessed=nbytes),
    )(x_c)


def trans_pallas(x, dim1, dim2):
    """Pallas equivalent of torch.Tensor.transpose(dim1, dim2)."""
    ndim = x.ndim
    dim1 %= ndim
    dim2 %= ndim
    out_shape = list(x.shape)
    out_shape[dim1], out_shape[dim2] = out_shape[dim2], out_shape[dim1]
    out_shape = tuple(out_shape)
    if dim1 == dim2:
        return x  # identity swap

    a, b = sorted((dim1, dim2))
    shape = x.shape
    P = math.prod(shape[:a])
    A = shape[a]
    M = math.prod(shape[a + 1:b])
    B = shape[b]
    T = math.prod(shape[b + 1:])

    itemsize = jnp.dtype(x.dtype).itemsize
    sub = max(8, 8 * (4 // itemsize))          # 8 f32 / 16 bf16 / 32 int8
    nbytes = 2 * x.size * itemsize             # read + write (pure copy)

    if T == 1:
        # Lane (last) axis participates in the swap: 2-D tile the swapped
        # (A, B) pair with 128-aligned tiles -> XLU block transpose,
        # lane-dense loads and stores.
        x_c = x.reshape(P, A, M, B)
        a_blk = _pick_tile(A, 128, 256)
        b_blk = _pick_tile(
            B, 128,
            max(128, _TARGET_BLOCK_BYTES // max(1, a_blk * M * itemsize)))
        grid = (P, A // a_blk, B // b_blk)
        in_spec = pl.BlockSpec((1, a_blk, M, b_blk),
                               lambda p, i, j: (p, i, 0, j))
        out_spec = pl.BlockSpec((1, b_blk, M, a_blk),
                                lambda p, i, j: (p, j, 0, i))
        out_struct = jax.ShapeDtypeStruct((P, B, M, A), x.dtype)
        out = _pallas_swap(_swap13_kernel, x_c, out_struct, grid,
                           in_spec, out_spec, nbytes)
        return out.reshape(out_shape)

    # General case: the trailing group T stays on the lane axis.
    x_c = x.reshape(P, A, M, B, T)
    row_bytes = A * M * T * itemsize           # one b-row with the full A
    if row_bytes * sub <= _MAX_BLOCK_BYTES:
        a_blk = A                              # keep A whole; tile along B
        b_blk = _pick_tile(B, sub, max(1, _TARGET_BLOCK_BYTES // row_bytes))
        merge = T < 128                        # lane-dense output pays off
    else:
        # Very large A*M*T: tile A too; skip the lane merge (alignment rules).
        b_blk = _pick_tile(B, sub, sub)
        a_blk = _pick_tile(
            A, sub,
            max(1, _TARGET_BLOCK_BYTES // (M * T * itemsize * b_blk)))
        merge = False

    grid = (P, A // a_blk, B // b_blk)
    in_spec = pl.BlockSpec((1, a_blk, M, b_blk, T),
                           lambda p, i, j: (p, i, 0, j, 0))

    plain_struct = jax.ShapeDtypeStruct((P, B, M, A, T), x.dtype)
    plain_spec = pl.BlockSpec((1, b_blk, M, a_blk, T),
                              lambda p, i, j: (p, j, 0, i, 0))

    if merge:
        merged_struct = jax.ShapeDtypeStruct((P, B, M, A * T), x.dtype)
        merged_spec = pl.BlockSpec((1, b_blk, M, a_blk * T),
                                   lambda p, i, j: (p, j, 0, i))
        try:
            out = _pallas_swap(_swap13_merge_kernel, x_c, merged_struct, grid,
                               in_spec, merged_spec, nbytes)
            return out.reshape(out_shape)
        except Exception:
            # Fallback if this Mosaic build rejects the in-kernel lane-merge
            # reshape; the plain 5-D layout below always lowers.
            pass

    out = _pallas_swap(_swap13_kernel, x_c, plain_struct, grid,
                       in_spec, plain_spec, nbytes)
    return out.reshape(out_shape)


if __name__ == "__main__":
    key = jax.random.PRNGKey(0)
    # The module is used as trans(dim1=1, dim2=2) on an NCHW tensor in oanet.
    N, C, H, W = 2, 4, 16, 16
    x = jax.random.normal(key, (N, C, H, W), dtype=jnp.float32)

    dim1, dim2 = 1, 2
    out = trans_pallas(x, dim1, dim2)
    out = jax.block_until_ready(out)

    # Reference: plain axes swap.
    ref = jnp.swapaxes(x, dim1, dim2)
    assert out.shape == (N, H, C, W), out.shape
    assert out.dtype == x.dtype, out.dtype
    assert jnp.array_equal(out, ref), "mismatch vs reference transpose"

    print("KERNEL_OK")
</pallas_src>

<mosaic_0001>
module attributes {stable_mosaic.version = 11 : i64} {
  func.func @_swap13_merge_kernel(%arg0: i32, %arg1: i32, %arg2: i32, %arg3: memref<1x4x1x16x16xf32, #tpu.memory_space<vmem>>, %arg4: memref<1x16x1x64xf32, #tpu.memory_space<vmem>>) attributes {dimension_semantics = [#tpu.dimension_semantics<parallel>, #tpu.dimension_semantics<parallel>, #tpu.dimension_semantics<parallel>], iteration_bounds = array<i64: 2, 1, 1>, scalar_prefetch = 0 : i64, scratch_operands = 0 : i64, tpu.core_type = #tpu.core_type<tc>, window_params = [{transform_indices = @transform_0, window_bounds = array<i64: 1, 4, 1, 16, 16>}, {transform_indices = @transform_1, window_bounds = array<i64: 1, 16, 1, 64>}]} {
    %c0 = arith.constant 0 : index
    %c0_0 = arith.constant 0 : index
    %c0_1 = arith.constant 0 : index
    %c0_2 = arith.constant 0 : index
    %c0_3 = arith.constant 0 : index
    %0 = vector.load %arg3[%c0, %c0_0, %c0_1, %c0_2, %c0_3] : memref<1x4x1x16x16xf32, #tpu.memory_space<vmem>>, vector<1x4x1x16x16xf32>
    %1 = tpu.transpose %0, [0, 3, 2, 1, 4] : vector<1x4x1x16x16xf32> -> vector<1x16x1x4x16xf32>
    %2 = vector.shape_cast %1 : vector<1x16x1x4x16xf32> to vector<1x16x1x64xf32>
    %c0_4 = arith.constant 0 : index
    %c0_5 = arith.constant 0 : index
    %c0_6 = arith.constant 0 : index
    %c0_7 = arith.constant 0 : index
    %3 = vector.load %arg4[%c0_4, %c0_5, %c0_6, %c0_7] : memref<1x16x1x64xf32, #tpu.memory_space<vmem>>, vector<1x16x1x64xf32>
    tpu.vector_store %arg4[%c0_4, %c0_5, %c0_6, %c0_7], %2 {strides = array<i32>} : memref<1x16x1x64xf32, #tpu.memory_space<vmem>>, vector<1x16x1x64xf32>,
    return
  }
  func.func @transform_0(%arg0: i32, %arg1: i32, %arg2: i32) -> (i32, i32, i32, i32, i32) {
    %c0_i32 = arith.constant 0 : i32
    %c0_i32_0 = arith.constant 0 : i32
    %c0_i32_1 = arith.constant 0 : i32
    return %arg0, %arg1, %c0_i32, %arg2, %c0_i32_0 : i32, i32, i32, i32, i32
  }
  func.func @transform_1(%arg0: i32, %arg1: i32, %arg2: i32) -> (i32, i32, i32, i32) {
    %c0_i32 = arith.constant 0 : i32
    %c0_i32_0 = arith.constant 0 : i32
    return %arg0, %arg2, %c0_i32, %arg1 : i32, i32, i32, i32
  }
}

module attributes {stable_mosaic.version = 11 : i64} {
  func.func @_swap13_kernel(%arg0: i32, %arg1: i32, %arg2: i32, %arg3: memref<1x4x1x16x16xf32, #tpu.memory_space<vmem>>, %arg4: memref<1x16x1x4x16xf32, #tpu.memory_space<vmem>>) attributes {dimension_semantics = [#tpu.dimension_semantics<parallel>, #tpu.dimension_semantics<parallel>, #tpu.dimension_semantics<parallel>], iteration_bounds = array<i64: 2, 1, 1>, scalar_prefetch = 0 : i64, scratch_operands = 0 : i64, tpu.core_type = #tpu.core_type<tc>, window_params = [{transform_indices = @transform_0, window_bounds = array<i64: 1, 4, 1, 16, 16>}, {transform_indices = @transform_1, window_bounds = array<i64: 1, 16, 1, 4, 16>}]} {
    %c0 = arith.constant 0 : index
    %c0_0 = arith.constant 0 : index
    %c0_1 = arith.constant 0 : index
    %c0_2 = arith.constant 0 : index
    %c0_3 = arith.constant 0 : index
    %0 = vector.load %arg3[%c0, %c0_0, %c0_1, %c0_2, %c0_3] : memref<1x4x1x16x16xf32, #tpu.memory_space<vmem>>, vector<1x4x1x16x16xf32>
    %1 = tpu.transpose %0, [0, 3, 2, 1, 4] : vector<1x4x1x16x16xf32> -> vector<1x16x1x4x16xf32>
    %c0_4 = arith.constant 0 : index
    %c0_5 = arith.constant 0 : index
    %c0_6 = arith.constant 0 : index
    %c0_7 = arith.constant 0 : index
    %c0_8 = arith.constant 0 : index
    %2 = vector.load %arg4[%c0_4, %c0_5, %c0_6, %c0_7, %c0_8] : memref<1x16x1x4x16xf32, #tpu.memory_space<vmem>>, vector<1x16x1x4x16xf32>
    tpu.vector_store %arg4[%c0_4, %c0_5, %c0_6, %c0_7, %c0_8], %1 {strides = array<i32>} : memref<1x16x1x4x16xf32, #tpu.memory_space<vmem>>, vector<1x16x1x4x16xf32>,
    return
  }
  func.func @transform_0(%arg0: i32, %arg1: i32, %arg2: i32) -> (i32, i32, i32, i32, i32) {
    %c0_i32 = arith.constant 0 : i32
    %c0_i32_0 = arith.constant 0 : i32
    %c0_i32_1 = arith.constant 0 : i32
    return %arg0, %arg1, %c0_i32, %arg2, %c0_i32_0 : i32, i32, i32, i32, i32
  }
  func.func @transform_1(%arg0: i32, %arg1: i32, %arg2: i32) -> (i32, i32, i32, i32, i32) {
    %c0_i32 = arith.constant 0 : i32
    %c0_i32_0 = arith.constant 0 : i32
    %c0_i32_1 = arith.constant 0 : i32
    return %arg0, %arg2, %c0_i32, %arg1, %c0_i32_0 : i32, i32, i32, i32, i32
  }
}

</mosaic_0001>

<llo_original>
// kernel: tpu_custom_call.1
$region0: #{tpu_custom_call.1}
  #allocation0 [shape = 'u32[]', space=smem, size = 0x4, offset = 0x4, fixed_abs, tag = 'smem constant byte address 0x4 - core index']
  #allocation1 [shape = 'u32[144,128]{1,0:T(1,128)}', space=vmem, size = 0x12000, scoped, tag = 'internal scratch']
  %s0 = inlined_call_operand.hbm [shape: f32[2,4,1,16,16], index: 0, kind: input, shape index: {}]
  %s1 = inlined_call_operand.hbm [shape: f32[2,16,1,64], index: 1, kind: output, shape index: {}]
  %s2 = sld [smem:[#allocation0]]
  $region41: #{tpu_custom_call.1} parent=0
    _
  %s4 = ssub.s32 1, %s2
  %s5 = scalar_select 0, %s4, %s2
  $region1: #{tpu_custom_call.1} parent=0
    #allocation2 [shape = 'u8[65536]{0}', space=vmem, size = 0x10000, scoped, tag = 'input window, operand 0']
    #allocation3 [shape = 's32[2]{0}', space=sflag, size = 0x8, scoped, tag = 'scoped memory for tpu_custom_call.1']
    #allocation4 [shape = 's32[2]{0}', space=sflag, size = 0x8, scoped, tag = 'scoped memory for tpu_custom_call.1']
    #allocation5 [shape = 'u8[16384]{0}', space=vmem, size = 0x4000, scoped, tag = 'output window, operand 0']
    %6 = vsyncpa [#allocation3], 0
    %s7 = scalar_lea.sflag [#allocation3], 1
    %8 = vsyncpa %s7, 0
    %9 = vsyncpa [#allocation4], 0
    %s10 = scalar_lea.sflag [#allocation4], 1
    %11 = vsyncpa %s10, 0
    loop: start=0, step=1, limit=4
    $region2: #{tpu_custom_call.1} parent=1 // loop_pre_header
      _
    $region3: #{tpu_custom_call.1} parent=1 // loop_header
      %s13 = sphi 0, %s17
      %p14 = scmp.ge.s32.totalorder %s13, 4
      %s20 = sphi 0, %s39
      %s21 = sphi 0, %s35
      %s22 = sphi 0, %s31
      %s23 = sphi 0, %s20
      %s24 = sphi 0, %s21
      %s25 = sphi 0, %s22
      %s26 = sphi 0, %s23
      %s27 = sphi 0, %s24
      %s28 = sphi 0, %s25
      %s46 = sphi 0, %s48
      %s49 = sphi 0, %s46
      %s50 = sphi 0, %s49
      %s66 = sphi 0, %s50
      %s76 = sphi 0, %s78
      %s79 = sphi 0, %s76
      %s80 = sphi 0, %s79
      %s96 = sphi 0, %s80
    $region4: #{tpu_custom_call.1} parent=1 // loop_header_branch
      %16 = sbr.rel (%p14) target = $region8
    $region5: #{tpu_custom_call.1} parent=1 // loop_body
      %s18 = ssub.s32 %s13, 1
      %s19 = ssub.s32 %s13, 2
      %s29 = sadd.s32 1, %s22
      %p30 = scmp.ge.s32.totalorder %s29, 1
      %s31 = scalar_select %p30, 0, %s29
      %s32 = sadd.s32 1, %s21
      %s33 = scalar_select %p30, %s32, %s21
      %p34 = scmp.ge.s32.totalorder %s33, 1
      %s35 = scalar_select %p34, 0, %s33
      %s36 = sadd.s32 1, %s20
      %s37 = scalar_select %p34, %s36, %s20
      %p38 = scmp.ge.s32.totalorder %s37, 2
      %s39 = scalar_select %p38, 0, %s37
      %s40 = ssub.s32 %s20, %s39
      %s41 = ssub.s32 %s21, %s35
      %s42 = sor.u32 %s40, %s41
      %s43 = ssub.s32 %s22, %s31
      %s44 = sor.u32 %s42, %s43
      %p45 = scmp.eq.s32.totalorder %s44, 0
      %s47 = sadd.s32 %s46, 1
      %s48 = scalar_select %p45, %s46, %s47
      %p51 = pneg %p45
      %p52 = scmp.eq.s32.totalorder %s13, 1
      %p53 = por %p51, %p52
      %p54 = scmp.ne.s32.totalorder %s46, %s49
      %p55 = scmp.eq.s32.totalorder %s13, 0
      %p56 = por %p54, %p55
      %p57 = scmp.ne.s32.totalorder %s46, %s49
      %p58 = scmp.eq.s32.totalorder %s18, 1
      %p59 = por %p57, %p58
      %p60 = scmp.ne.s32.totalorder %s49, %s50
      %p61 = scmp.eq.s32.totalorder %s18, 0
      %p62 = por %p60, %p61
      %p63 = scmp.ne.s32.totalorder %s49, %s50
      %p64 = scmp.eq.s32.totalorder %s19, 1
      %p65 = por %p63, %p64
      %p67 = scmp.ne.s32.totalorder %s50, %s66
      %p68 = scmp.eq.s32.totalorder %s19, 0
      %p69 = por %p67, %p68
      %s70 = ssub.s32 %s20, %s39
      %s71 = ssub.s32 %s22, %s31
      %s72 = sor.u32 %s70, %s71
      %s73 = ssub.s32 %s21, %s35
      %s74 = sor.u32 %s72, %s73
      %p75 = scmp.eq.s32.totalorder %s74, 0
      %s77 = sadd.s32 %s76, 1
      %s78 = scalar_select %p75, %s76, %s77
      %p81 = pneg %p75
      %p82 = scmp.eq.s32.totalorder %s13, 1
      %p83 = por %p81, %p82
      %p84 = scmp.ne.s32.totalorder %s76, %s79
      %p85 = scmp.eq.s32.totalorder %s13, 0
      %p86 = por %p84, %p85
      %p87 = scmp.ne.s32.totalorder %s76, %s79
      %p88 = scmp.eq.s32.totalorder %s18, 1
      %p89 = por %p87, %p88
      %p90 = scmp.ne.s32.totalorder %s79, %s80
      %p91 = scmp.eq.s32.totalorder %s18, 0
      %p92 = por %p90, %p91
      %p93 = scmp.ne.s32.totalorder %s79, %s80
      %p94 = scmp.eq.s32.totalorder %s19, 1
      %p95 = por %p93, %p94
      %p97 = scmp.ne.s32.totalorder %s80, %s96
      %p98 = scmp.eq.s32.totalorder %s19, 0
      %p99 = por %p97, %p98
      %p100 = scmp.le.s32.totalorder 1, %s13
      %p101 = scmp.lt.s32.totalorder %s13, 3
      %p102 = pnand %p100, %p101
      %p103 = pneg %p102
      // Predicated region
      $region9: #{tpu_custom_call.1} parent=5 // pred_check
        _
      $region10: #{tpu_custom_call.1} parent=5 // pred_check_branch
        %105 = sbr.rel (%p102) target = $region12
      $region11: #{tpu_custom_call.1} parent=5 // pred_region
        %s106 = ssub.s32 %s13, 1
      $region12: #{tpu_custom_call.1} parent=5 // pred_fallthru
        _
      %p107 = scmp.lt.s32.totalorder %s13, 2
      // Predicated region
      $region13: #{tpu_custom_call.1} parent=5 // pred_check
        %p108 = pneg %p107
      $region14: #{tpu_custom_call.1} parent=5 // pred_check_branch
        %110 = sbr.rel (%p108) target = $region16
      $region15: #{tpu_custom_call.1} parent=5 // pred_region
        // Predicated region
        $region17: #{tpu_custom_call.1} parent=15 // pred_check
          %p111 = pneg %p56
        $region18: #{tpu_custom_call.1} parent=15 // pred_check_branch
          %113 = sbr.rel (%p111) target = $region20
        $region19: #{tpu_custom_call.1} parent=15 // pred_region
          %s114 = sand.u32 %s46, 1
          %s115 = scalar_lea.sflag [#allocation3], %s114
          %s116 = sand.u32 %s46, 1
          %s117 = smul.addr %s116, 64
          %s118 = scalar_lea.vmem [#allocation2], %s117
          %s119 = smul.u32 4, %s21
          %s120 = smul.u32 2, %s22
          %s122 = ssub.s32 1024, 1024
          %123 = vsyncadd %s115, %s122
          %s124 = smul.addr %s119, 2
          %s125 = sadd.s32 %s120, %s124
          %s126 = smul.addr %s20, 8
          %s127 = sadd.s32 %s125, %s126
          %s128 = smul.addr %s127, 128
          %s129 = scalar_lea.hbm %s0, %s128
          %s130 = sshll.u32 %s118, 4
          %s131 = int_to_ptr.vmem [resolvable:$true] %s130
          %136 = dma.hbm_to_vmem [thread:$0]  %s129, 1024, %s131, %s115, 128, 128, 8
        $region20: #{tpu_custom_call.1} parent=15 // pred_fallthru
          _
      $region16: #{tpu_custom_call.1} parent=5 // pred_fallthru
        _
      %p137 = scmp.le.s32.totalorder 1, %s13
      %p138 = scmp.lt.s32.totalorder %s13, 3
      %p139 = pnand %p137, %p138
      %p140 = pneg %p139
      // Predicated region
      $region21: #{tpu_custom_call.1} parent=5 // pred_check
        _
      $region22: #{tpu_custom_call.1} parent=5 // pred_check_branch
        %142 = sbr.rel (%p139) target = $region24
      $region23: #{tpu_custom_call.1} parent=5 // pred_region
        %s143 = ssub.s32 %s13, 1
        %s144 = sand.u32 %s49, 1
        %s145 = scalar_lea.sflag [#allocation3], %s144
        %s146 = sand.u32 %s49, 1
        %s147 = smul.addr %s146, 64
        %s148 = scalar_lea.vmem [#allocation2], %s147
        // Predicated region
        $region25: #{tpu_custom_call.1} parent=23 // pred_check
          %p149 = pneg %p62
        $region26: #{tpu_custom_call.1} parent=23 // pred_check_branch
          %151 = sbr.rel (%p149) target = $region28
        $region27: #{tpu_custom_call.1} parent=23 // pred_region
          %152 = dma.done %s145, 1024
        $region28: #{tpu_custom_call.1} parent=23 // pred_fallthru
          _
        %s153 = sand.u32 %s49, 1
        %s154 = scalar_lea.sflag [#allocation3], %s153
        %s155 = sand.u32 %s49, 1
        %s156 = smul.addr %s155, 64
        %s157 = scalar_lea.vmem [#allocation2], %s156
        %p158 = pneg %p62
        %p159 = pneg %p59
        %p160 = pneg %p92
        %p161 = pneg %p89
        %s162 = sand.u32 %s79, 1
        %s163 = scalar_lea.sflag [#allocation4], %s162
        %s164 = sand.u32 %s79, 1
        %s165 = smul.addr %s164, 16
        %s166 = scalar_lea.vmem [#allocation5], %s165
        %s167 = smul.u32 4, %s24
        %s168 = smul.u32 2, %s25
        %s169 = smul.u32 16, %s25
        %v170 = vld [vmem:[%s148] sm:$0xff]
        %v171 = vld [vmem:[%s148 + $0x8] sm:$0xff]
        %v172 = vld [vmem:[%s148 + $0x10] sm:$0xff]
        %v173 = vld [vmem:[%s148 + $0x18] sm:$0xff]
        %v174 = vld [vmem:[%s148 + $0x20] sm:$0xff]
        %v175 = vld [vmem:[%s148 + $0x28] sm:$0xff]
        %v176 = vld [vmem:[%s148 + $0x30] sm:$0xff]
        %v177 = vld [vmem:[%s148 + $0x38] sm:$0xff]
        %v178 = vcombine.low %v170, %v174
        %v179 = vcombine.high %v170, %v174
        %v181 = vunpack.c.l.s4 1983009808
        %v182 = vunpack.c.0.s8 %v181
        %v183 = vlaneseq
        %v184 = vshrl.u32 %v183, 7
        %v185 = vsub.s32 %v182, %v184
        %v186 = vrot.slane %v178, %v185
        %v188 = vunpack.c.l.s4 1983009808
        %v189 = vunpack.c.0.s8 %v188
        %v190 = vlaneseq
        %v191 = vshrl.u32 %v190, 7
        %v192 = vsub.s32 %v189, %v191
        %v193 = vrot.slane %v179, %v192
        %v194 = vcombine.low %v172, %v176
        %v195 = vcombine.high %v172, %v176
        %v197 = vunpack.c.l.s4 1983009808
        %v198 = vunpack.c.0.s8 %v197
        %v199 = vlaneseq
        %v200 = vshrl.u32 %v199, 7
        %v201 = vsub.s32 %v198, %v200
        %v202 = vrot.slane %v194, %v201
        %v204 = vunpack.c.l.s4 1983009808
        %v205 = vunpack.c.0.s8 %v204
        %v206 = vlaneseq
        %v207 = vshrl.u32 %v206, 7
        %v208 = vsub.s32 %v205, %v207
        %v209 = vrot.slane %v195, %v208
        %v210 = vcombine.low %v186, %v202
        %v211 = vcombine.high %v186, %v202
        %v213 = vunpack.c.l.s4 1934713408
        %v214 = vunpack.c.0.s8 %v213
        %v215 = vlaneseq
        %v216 = vshrl.u32 %v215, 7
        %v217 = vsub.s32 %v214, %v216
        %v218 = vrot.slane %v210, %v217
        %v220 = vunpack.c.l.s4 1934713408
        %v221 = vunpack.c.0.s8 %v220
        %v222 = vlaneseq
        %v223 = vshrl.u32 %v222, 7
        %v224 = vsub.s32 %v221, %v223
        %v225 = vrot.slane %v211, %v224
        %v226 = vcombine.low %v193, %v209
        %v227 = vcombine.high %v193, %v209
        %v229 = vunpack.c.l.s4 1934713408
        %v230 = vunpack.c.0.s8 %v229
        %v231 = vlaneseq
        %v232 = vshrl.u32 %v231, 7
        %v233 = vsub.s32 %v230, %v232
        %v234 = vrot.slane %v226, %v233
        %v236 = vunpack.c.l.s4 1934713408
        %v237 = vunpack.c.0.s8 %v236
        %v238 = vlaneseq
        %v239 = vshrl.u32 %v238, 7
        %v240 = vsub.s32 %v237, %v239
        %v241 = vrot.slane %v227, %v240
        %v242 = vcombine.low %v171, %v175
        %v243 = vcombine.high %v171, %v175
        %v245 = vunpack.c.l.s4 1983009808
        %v246 = vunpack.c.0.s8 %v245
        %v247 = vlaneseq
        %v248 = vshrl.u32 %v247, 7
        %v249 = vsub.s32 %v246, %v248
        %v250 = vrot.slane %v242, %v249
        %v252 = vunpack.c.l.s4 1983009808
        %v253 = vunpack.c.0.s8 %v252
        %v254 = vlaneseq
        %v255 = vshrl.u32 %v254, 7
        %v256 = vsub.s32 %v253, %v255
        %v257 = vrot.slane %v243, %v256
        %v258 = vcombine.low %v173, %v177
        %v259 = vcombine.high %v173, %v177
        %v261 = vunpack.c.l.s4 1983009808
        %v262 = vunpack.c.0.s8 %v261
        %v263 = vlaneseq
        %v264 = vshrl.u32 %v263, 7
        %v265 = vsub.s32 %v262, %v264
        %v266 = vrot.slane %v258, %v265
        %v268 = vunpack.c.l.s4 1983009808
        %v269 = vunpack.c.0.s8 %v268
        %v270 = vlaneseq
        %v271 = vshrl.u32 %v270, 7
        %v272 = vsub.s32 %v269, %v271
        %v273 = vrot.slane %v259, %v272
        %v274 = vcombine.low %v250, %v266
        %v275 = vcombine.high %v250, %v266
        %v277 = vunpack.c.l.s4 1934713408
        %v278 = vunpack.c.0.s8 %v277
        %v279 = vlaneseq
        %v280 = vshrl.u32 %v279, 7
        %v281 = vsub.s32 %v278, %v280
        %v282 = vrot.slane %v274, %v281
        %v284 = vunpack.c.l.s4 1934713408
        %v285 = vunpack.c.0.s8 %v284
        %v286 = vlaneseq
        %v287 = vshrl.u32 %v286, 7
        %v288 = vsub.s32 %v285, %v287
        %v289 = vrot.slane %v275, %v288
        %v290 = vcombine.low %v257, %v273
        %v291 = vcombine.high %v257, %v273
        %v293 = vunpack.c.l.s4 1934713408
        %v294 = vunpack.c.0.s8 %v293
        %v295 = vlaneseq
        %v296 = vshrl.u32 %v295, 7
        %v297 = vsub.s32 %v294, %v296
        %v298 = vrot.slane %v290, %v297
        %v300 = vunpack.c.l.s4 1934713408
        %v301 = vunpack.c.0.s8 %v300
        %v302 = vlaneseq
        %v303 = vshrl.u32 %v302, 7
        %v304 = vsub.s32 %v301, %v303
        %v305 = vrot.slane %v291, %v304
        %v307 = vunpack.c.l.s4 1983009808
        %v308 = vunpack.c.0.s8 %v307
        %v309 = vlaneseq
        %v310 = vshrl.u32 %v309, 7
        %v311 = vsub.s32 %v308, %v310
        %v312 = vrot.slane %v218, %v311
        %v313 = vcombine.high %v312, 0.0
        %v315 = vunpack.c.l.s4 1934713408
        %v316 = vunpack.c.0.s8 %v315
        %v317 = vlaneseq
        %v318 = vshrl.u32 %v317, 7
        %v319 = vsub.s32 %v316, %v318
        %v320 = vrot.slane %v312, %v319
        %v322 = vunpack.c.l.s4 1934713408
        %v323 = vunpack.c.0.s8 %v322
        %v324 = vlaneseq
        %v325 = vshrl.u32 %v324, 7
        %v326 = vsub.s32 %v323, %v325
        %v327 = vrot.slane %v313, %v326
        %v328 = vcombine.high %v320, 0.0
        %v329 = vcombine.high %v327, 0.0
        %v330 = vcombine.high %v218, 0.0
        %v332 = vunpack.c.l.s4 1983009808
        %v333 = vunpack.c.0.s8 %v332
        %v334 = vlaneseq
        %v335 = vshrl.u32 %v334, 7
        %v336 = vsub.s32 %v333, %v335
        %v337 = vrot.slane %v330, %v336
        %v338 = vcombine.high %v337, 0.0
        %v340 = vunpack.c.l.s4 1934713408
        %v341 = vunpack.c.0.s8 %v340
        %v342 = vlaneseq
        %v343 = vshrl.u32 %v342, 7
        %v344 = vsub.s32 %v341, %v343
        %v345 = vrot.slane %v337, %v344
        %v347 = vunpack.c.l.s4 1934713408
        %v348 = vunpack.c.0.s8 %v347
        %v349 = vlaneseq
        %v350 = vshrl.u32 %v349, 7
        %v351 = vsub.s32 %v348, %v350
        %v352 = vrot.slane %v338, %v351
        %v353 = vcombine.high %v345, 0.0
        %v354 = vcombine.high %v352, 0.0
        %v356 = vunpack.c.l.s4 1983009808
        %v357 = vunpack.c.0.s8 %v356
        %v358 = vlaneseq
        %v359 = vshrl.u32 %v358, 7
        %v360 = vsub.s32 %v357, %v359
        %v361 = vrot.slane %v225, %v360
        %v362 = vcombine.high %v361, 0.0
        %v364 = vunpack.c.l.s4 1934713408
        %v365 = vunpack.c.0.s8 %v364
        %v366 = vlaneseq
        %v367 = vshrl.u32 %v366, 7
        %v368 = vsub.s32 %v365, %v367
        %v369 = vrot.slane %v361, %v368
        %v371 = vunpack.c.l.s4 1934713408
        %v372 = vunpack.c.0.s8 %v371
        %v373 = vlaneseq
        %v374 = vshrl.u32 %v373, 7
        %v375 = vsub.s32 %v372, %v374
        %v376 = vrot.slane %v362, %v375
        %v377 = vcombine.high %v369, 0.0
        %v378 = vcombine.high %v376, 0.0
        %v379 = vcombine.high %v225, 0.0
        %v381 = vunpack.c.l.s4 1983009808
        %v382 = vunpack.c.0.s8 %v381
        %v383 = vlaneseq
        %v384 = vshrl.u32 %v383, 7
        %v385 = vsub.s32 %v382, %v384
        %v386 = vrot.slane %v379, %v385
        %v387 = vcombine.high %v386, 0.0
        %v389 = vunpack.c.l.s4 1934713408
        %v390 = vunpack.c.0.s8 %v389
        %v391 = vlaneseq
        %v392 = vshrl.u32 %v391, 7
        %v393 = vsub.s32 %v390, %v392
        %v394 = vrot.slane %v386, %v393
        %v396 = vunpack.c.l.s4 1934713408
        %v397 = vunpack.c.0.s8 %v396
        %v398 = vlaneseq
        %v399 = vshrl.u32 %v398, 7
        %v400 = vsub.s32 %v397, %v399
        %v401 = vrot.slane %v387, %v400
        %v402 = vcombine.high %v394, 0.0
        %v403 = vcombine.high %v401, 0.0
        %v405 = vunpack.c.l.s4 1983009808
        %v406 = vunpack.c.0.s8 %v405
        %v407 = vlaneseq
        %v408 = vshrl.u32 %v407, 7
        %v409 = vsub.s32 %v406, %v408
        %v410 = vrot.slane %v234, %v409
        %v411 = vcombine.high %v410, 0.0
        %v413 = vunpack.c.l.s4 1934713408
        %v414 = vunpack.c.0.s8 %v413
        %v415 = vlaneseq
        %v416 = vshrl.u32 %v415, 7
        %v417 = vsub.s32 %v414, %v416
        %v418 = vrot.slane %v410, %v417
        %v420 = vunpack.c.l.s4 1934713408
        %v421 = vunpack.c.0.s8 %v420
        %v422 = vlaneseq
        %v423 = vshrl.u32 %v422, 7
        %v424 = vsub.s32 %v421, %v423
        %v425 = vrot.slane %v411, %v424
        %v426 = vcombine.high %v418, 0.0
        %v427 = vcombine.high %v425, 0.0
        %v428 = vcombine.high %v234, 0.0
        %v430 = vunpack.c.l.s4 1983009808
        %v431 = vunpack.c.0.s8 %v430
        %v432 = vlaneseq
        %v433 = vshrl.u32 %v432, 7
        %v434 = vsub.s32 %v431, %v433
        %v435 = vrot.slane %v428, %v434
        %v436 = vcombine.high %v435, 0.0
        %v438 = vunpack.c.l.s4 1934713408
        %v439 = vunpack.c.0.s8 %v438
        %v440 = vlaneseq
        %v441 = vshrl.u32 %v440, 7
        %v442 = vsub.s32 %v439, %v441
        %v443 = vrot.slane %v435, %v442
        %v445 = vunpack.c.l.s4 1934713408
        %v446 = vunpack.c.0.s8 %v445
        %v447 = vlaneseq
        %v448 = vshrl.u32 %v447, 7
        %v449 = vsub.s32 %v446, %v448
        %v450 = vrot.slane %v436, %v449
        %v451 = vcombine.high %v443, 0.0
        %v452 = vcombine.high %v450, 0.0
        %v454 = vunpack.c.l.s4 1983009808
        %v455 = vunpack.c.0.s8 %v454
        %v456 = vlaneseq
        %v457 = vshrl.u32 %v456, 7
        %v458 = vsub.s32 %v455, %v457
        %v459 = vrot.slane %v241, %v458
        %v460 = vcombine.high %v459, 0.0
        %v462 = vunpack.c.l.s4 1934713408
        %v463 = vunpack.c.0.s8 %v462
        %v464 = vlaneseq
        %v465 = vshrl.u32 %v464, 7
        %v466 = vsub.s32 %v463, %v465
        %v467 = vrot.slane %v459, %v466
        %v469 = vunpack.c.l.s4 1934713408
        %v470 = vunpack.c.0.s8 %v469
        %v471 = vlaneseq
        %v472 = vshrl.u32 %v471, 7
        %v473 = vsub.s32 %v470, %v472
        %v474 = vrot.slane %v460, %v473
        %v475 = vcombine.high %v467, 0.0
        %v476 = vcombine.high %v474, 0.0
        %v477 = vcombine.high %v241, 0.0
        %v479 = vunpack.c.l.s4 1983009808
        %v480 = vunpack.c.0.s8 %v479
        %v481 = vlaneseq
        %v482 = vshrl.u32 %v481, 7
        %v483 = vsub.s32 %v480, %v482
        %v484 = vrot.slane %v477, %v483
        %v485 = vcombine.high %v484, 0.0
        %v487 = vunpack.c.l.s4 1934713408
        %v488 = vunpack.c.0.s8 %v487
        %v489 = vlaneseq
        %v490 = vshrl.u32 %v489, 7
        %v491 = vsub.s32 %v488, %v490
        %v492 = vrot.slane %v484, %v491
        %v494 = vunpack.c.l.s4 1934713408
        %v495 = vunpack.c.0.s8 %v494
        %v496 = vlaneseq
        %v497 = vshrl.u32 %v496, 7
        %v498 = vsub.s32 %v495, %v497
        %v499 = vrot.slane %v485, %v498
        %v500 = vcombine.high %v492, 0.0
        %v501 = vcombine.high %v499, 0.0
        %v503 = vunpack.c.l.s4 1983009808
        %v504 = vunpack.c.0.s8 %v503
        %v505 = vlaneseq
        %v506 = vshrl.u32 %v505, 7
        %v507 = vsub.s32 %v504, %v506
        %v508 = vrot.slane %v282, %v507
        %v509 = vcombine.high %v508, 0.0
        %v511 = vunpack.c.l.s4 1934713408
        %v512 = vunpack.c.0.s8 %v511
        %v513 = vlaneseq
        %v514 = vshrl.u32 %v513, 7
        %v515 = vsub.s32 %v512, %v514
        %v516 = vrot.slane %v508, %v515
        %v518 = vunpack.c.l.s4 1934713408
        %v519 = vunpack.c.0.s8 %v518
        %v520 = vlaneseq
        %v521 = vshrl.u32 %v520, 7
        %v522 = vsub.s32 %v519, %v521
        %v523 = vrot.slane %v509, %v522
        %v524 = vcombine.high %v516, 0.0
        %v525 = vcombine.high %v523, 0.0
        %v526 = vcombine.high %v282, 0.0
        %v528 = vunpack.c.l.s4 1983009808
        %v529 = vunpack.c.0.s8 %v528
        %v530 = vlaneseq
        %v531 = vshrl.u32 %v530, 7
        %v532 = vsub.s32 %v529, %v531
        %v533 = vrot.slane %v526, %v532
        %v534 = vcombine.high %v533, 0.0
        %v536 = vunpack.c.l.s4 1934713408
        %v537 = vunpack.c.0.s8 %v536
        %v538 = vlaneseq
        %v539 = vshrl.u32 %v538, 7
        %v540 = vsub.s32 %v537, %v539
        %v541 = vrot.slane %v533, %v540
        %v543 = vunpack.c.l.s4 1934713408
        %v544 = vunpack.c.0.s8 %v543
        %v545 = vlaneseq
        %v546 = vshrl.u32 %v545, 7
        %v547 = vsub.s32 %v544, %v546
        %v548 = vrot.slane %v534, %v547
        %v549 = vcombine.high %v541, 0.0
        %v550 = vcombine.high %v548, 0.0
        %v552 = vunpack.c.l.s4 1983009808
        %v553 = vunpack.c.0.s8 %v552
        %v554 = vlaneseq
        %v555 = vshrl.u32 %v554, 7
        %v556 = vsub.s32 %v553, %v555
        %v557 = vrot.slane %v289, %v556
        %v558 = vcombine.high %v557, 0.0
        %v560 = vunpack.c.l.s4 1934713408
        %v561 = vunpack.c.0.s8 %v560
        %v562 = vlaneseq
        %v563 = vshrl.u32 %v562, 7
        %v564 = vsub.s32 %v561, %v563
        %v565 = vrot.slane %v557, %v564
        %v567 = vunpack.c.l.s4 1934713408
        %v568 = vunpack.c.0.s8 %v567
        %v569 = vlaneseq
        %v570 = vshrl.u32 %v569, 7
        %v571 = vsub.s32 %v568, %v570
        %v572 = vrot.slane %v558, %v571
        %v573 = vcombine.high %v565, 0.0
        %v574 = vcombine.high %v572, 0.0
        %v575 = vcombine.high %v289, 0.0
        %v577 = vunpack.c.l.s4 1983009808
        %v578 = vunpack.c.0.s8 %v577
        %v579 = vlaneseq
        %v580 = vshrl.u32 %v579, 7
        %v581 = vsub.s32 %v578, %v580
        %v582 = vrot.slane %v575, %v581
        %v583 = vcombine.high %v582, 0.0
        %v585 = vunpack.c.l.s4 1934713408
        %v586 = vunpack.c.0.s8 %v585
        %v587 = vlaneseq
        %v588 = vshrl.u32 %v587, 7
        %v589 = vsub.s32 %v586, %v588
        %v590 = vrot.slane %v582, %v589
        %v592 = vunpack.c.l.s4 1934713408
        %v593 = vunpack.c.0.s8 %v592
        %v594 = vlaneseq
        %v595 = vshrl.u32 %v594, 7
        %v596 = vsub.s32 %v593, %v595
        %v597 = vrot.slane %v583, %v596
        %v598 = vcombine.high %v590, 0.0
        %v599 = vcombine.high %v597, 0.0
        %v601 = vunpack.c.l.s4 1983009808
        %v602 = vunpack.c.0.s8 %v601
        %v603 = vlaneseq
        %v604 = vshrl.u32 %v603, 7
        %v605 = vsub.s32 %v602, %v604
        %v606 = vrot.slane %v298, %v605
        %v607 = vcombine.high %v606, 0.0
        %v609 = vunpack.c.l.s4 1934713408
        %v610 = vunpack.c.0.s8 %v609
        %v611 = vlaneseq
        %v612 = vshrl.u32 %v611, 7
        %v613 = vsub.s32 %v610, %v612
        %v614 = vrot.slane %v606, %v613
        %v616 = vunpack.c.l.s4 1934713408
        %v617 = vunpack.c.0.s8 %v616
        %v618 = vlaneseq
        %v619 = vshrl.u32 %v618, 7
        %v620 = vsub.s32 %v617, %v619
        %v621 = vrot.slane %v607, %v620
        %v622 = vcombine.high %v614, 0.0
        %v623 = vcombine.high %v621, 0.0
        %v624 = vcombine.high %v298, 0.0
        %v626 = vunpack.c.l.s4 1983009808
        %v627 = vunpack.c.0.s8 %v626
        %v628 = vlaneseq
        %v629 = vshrl.u32 %v628, 7
        %v630 = vsub.s32 %v627, %v629
        %v631 = vrot.slane %v624, %v630
        %v632 = vcombine.high %v631, 0.0
        %v634 = vunpack.c.l.s4 1934713408
        %v635 = vunpack.c.0.s8 %v634
        %v636 = vlaneseq
        %v637 = vshrl.u32 %v636, 7
        %v638 = vsub.s32 %v635, %v637
        %v639 = vrot.slane %v631, %v638
        %v641 = vunpack.c.l.s4 1934713408
        %v642 = vunpack.c.0.s8 %v641
        %v643 = vlaneseq
        %v644 = vshrl.u32 %v643, 7
        %v645 = vsub.s32 %v642, %v644
        %v646 = vrot.slane %v632, %v645
        %v647 = vcombine.high %v639, 0.0
        %v648 = vcombine.high %v646, 0.0
        %v650 = vunpack.c.l.s4 1983009808
        %v651 = vunpack.c.0.s8 %v650
        %v652 = vlaneseq
        %v653 = vshrl.u32 %v652, 7
        %v654 = vsub.s32 %v651, %v653
        %v655 = vrot.slane %v305, %v654
        %v656 = vcombine.high %v655, 0.0
        %v658 = vunpack.c.l.s4 1934713408
        %v659 = vunpack.c.0.s8 %v658
        %v660 = vlaneseq
        %v661 = vshrl.u32 %v660, 7
        %v662 = vsub.s32 %v659, %v661
        %v663 = vrot.slane %v655, %v662
        %v665 = vunpack.c.l.s4 1934713408
        %v666 = vunpack.c.0.s8 %v665
        %v667 = vlaneseq
        %v668 = vshrl.u32 %v667, 7
        %v669 = vsub.s32 %v666, %v668
        %v670 = vrot.slane %v656, %v669
        %v671 = vcombine.high %v663, 0.0
        %v672 = vcombine.high %v670, 0.0
        %v673 = vcombine.high %v305, 0.0
        %v675 = vunpack.c.l.s4 1983009808
        %v676 = vunpack.c.0.s8 %v675
        %v677 = vlaneseq
        %v678 = vshrl.u32 %v677, 7
        %v679 = vsub.s32 %v676, %v678
        %v680 = vrot.slane %v673, %v679
        %v681 = vcombine.high %v680, 0.0
        %v683 = vunpack.c.l.s4 1934713408
        %v684 = vunpack.c.0.s8 %v683
        %v685 = vlaneseq
        %v686 = vshrl.u32 %v685, 7
        %v687 = vsub.s32 %v684, %v686
        %v688 = vrot.slane %v680, %v687
        %v690 = vunpack.c.l.s4 1934713408
        %v691 = vunpack.c.0.s8 %v690
        %v692 = vlaneseq
        %v693 = vshrl.u32 %v692, 7
        %v694 = vsub.s32 %v691, %v693
        %v695 = vrot.slane %v681, %v694
        %v696 = vcombine.high %v688, 0.0
        %v697 = vcombine.high %v695, 0.0
        %714 = vrot.lane.b32.xlu0 %v328, 16
        %v715 = vpop.permute.xlu0 %714
        %716 = vrot.lane.b32.xlu0 %v353, 16
        %v717 = vpop.permute.xlu0 %716
        %718 = vrot.lane.b32.xlu0 %v377, 16
        %v719 = vpop.permute.xlu0 %718
        %720 = vrot.lane.b32.xlu0 %v402, 16
        %v721 = vpop.permute.xlu0 %720
        %722 = vrot.lane.b32.xlu0 %v426, 16
        %v723 = vpop.permute.xlu0 %722
        %724 = vrot.lane.b32.xlu0 %v451, 16
        %v725 = vpop.permute.xlu0 %724
        %726 = vrot.lane.b32.xlu0 %v475, 16
        %v727 = vpop.permute.xlu0 %726
        %728 = vrot.lane.b32.xlu0 %v500, 16
        %v729 = vpop.permute.xlu0 %728
        %730 = vrot.lane.b32.xlu0 %v524, 16
        %v731 = vpop.permute.xlu0 %730
        %732 = vrot.lane.b32.xlu0 %v549, 16
        %v733 = vpop.permute.xlu0 %732
        %734 = vrot.lane.b32.xlu0 %v573, 16
        %v735 = vpop.permute.xlu0 %734
        %736 = vrot.lane.b32.xlu0 %v598, 16
        %v737 = vpop.permute.xlu0 %736
        %738 = vrot.lane.b32.xlu0 %v622, 16
        %v739 = vpop.permute.xlu0 %738
        %740 = vrot.lane.b32.xlu0 %v647, 16
        %v741 = vpop.permute.xlu0 %740
        %742 = vrot.lane.b32.xlu0 %v671, 16
        %v743 = vpop.permute.xlu0 %742
        %744 = vrot.lane.b32.xlu0 %v696, 16
        %v745 = vpop.permute.xlu0 %744
        %778 = vrot.lane.b32.xlu0 %v327, 32
        %v779 = vpop.permute.xlu0 %778
        %780 = vrot.lane.b32.xlu0 %v352, 32
        %v781 = vpop.permute.xlu0 %780
        %782 = vrot.lane.b32.xlu0 %v376, 32
        %v783 = vpop.permute.xlu0 %782
        %784 = vrot.lane.b32.xlu0 %v401, 32
        %v785 = vpop.permute.xlu0 %784
        %786 = vrot.lane.b32.xlu0 %v425, 32
        %v787 = vpop.permute.xlu0 %786
        %788 = vrot.lane.b32.xlu0 %v450, 32
        %v789 = vpop.permute.xlu0 %788
        %790 = vrot.lane.b32.xlu0 %v474, 32
        %v791 = vpop.permute.xlu0 %790
        %792 = vrot.lane.b32.xlu0 %v499, 32
        %v793 = vpop.permute.xlu0 %792
        %794 = vrot.lane.b32.xlu0 %v523, 32
        %v795 = vpop.permute.xlu0 %794
        %796 = vrot.lane.b32.xlu0 %v548, 32
        %v797 = vpop.permute.xlu0 %796
        %798 = vrot.lane.b32.xlu0 %v572, 32
        %v799 = vpop.permute.xlu0 %798
        %800 = vrot.lane.b32.xlu0 %v597, 32
        %v801 = vpop.permute.xlu0 %800
        %802 = vrot.lane.b32.xlu0 %v621, 32
        %v803 = vpop.permute.xlu0 %802
        %804 = vrot.lane.b32.xlu0 %v646, 32
        %v805 = vpop.permute.xlu0 %804
        %806 = vrot.lane.b32.xlu0 %v670, 32
        %v807 = vpop.permute.xlu0 %806
        %808 = vrot.lane.b32.xlu0 %v695, 32
        %v809 = vpop.permute.xlu0 %808
        %842 = vrot.lane.b32.xlu0 %v329, 48
        %v843 = vpop.permute.xlu0 %842
        %844 = vrot.lane.b32.xlu0 %v354, 48
        %v845 = vpop.permute.xlu0 %844
        %846 = vrot.lane.b32.xlu0 %v378, 48
        %v847 = vpop.permute.xlu0 %846
        %848 = vrot.lane.b32.xlu0 %v403, 48
        %v849 = vpop.permute.xlu0 %848
        %850 = vrot.lane.b32.xlu0 %v427, 48
        %v851 = vpop.permute.xlu0 %850
        %852 = vrot.lane.b32.xlu0 %v452, 48
        %v853 = vpop.permute.xlu0 %852
        %854 = vrot.lane.b32.xlu0 %v476, 48
        %v855 = vpop.permute.xlu0 %854
        %856 = vrot.lane.b32.xlu0 %v501, 48
        %v857 = vpop.permute.xlu0 %856
        %858 = vrot.lane.b32.xlu0 %v525, 48
        %v859 = vpop.permute.xlu0 %858
        %860 = vrot.lane.b32.xlu0 %v550, 48
        %v861 = vpop.permute.xlu0 %860
        %862 = vrot.lane.b32.xlu0 %v574, 48
        %v863 = vpop.permute.xlu0 %862
        %864 = vrot.lane.b32.xlu0 %v599, 48
        %v865 = vpop.permute.xlu0 %864
        %866 = vrot.lane.b32.xlu0 %v623, 48
        %v867 = vpop.permute.xlu0 %866
        %868 = vrot.lane.b32.xlu0 %v648, 48
        %v869 = vpop.permute.xlu0 %868
        %870 = vrot.lane.b32.xlu0 %v672, 48
        %v871 = vpop.permute.xlu0 %870
        %872 = vrot.lane.b32.xlu0 %v697, 48
        %v873 = vpop.permute.xlu0 %872
        %vm890 = vcmask 130048
        %v891 = vsel %vm890, %v320, %v715
        %v892 = vsel %vm890, %v345, %v717
        %v893 = vsel %vm890, %v369, %v719
        %v894 = vsel %vm890, %v394, %v721
        %v895 = vsel %vm890, %v418, %v723
        %v896 = vsel %vm890, %v443, %v725
        %v897 = vsel %vm890, %v467, %v727
        %v898 = vsel %vm890, %v492, %v729
        %v899 = vsel %vm890, %v516, %v731
        %v900 = vsel %vm890, %v541, %v733
        %v901 = vsel %vm890, %v565, %v735
        %v902 = vsel %vm890, %v590, %v737
        %v903 = vsel %vm890, %v614, %v739
        %v904 = vsel %vm890, %v639, %v741
        %v905 = vsel %vm890, %v663, %v743
        %v906 = vsel %vm890, %v688, %v745
        %vm907 = vcmask 261120
        %v908 = vsel %vm907, %v891, %v779
        %v909 = vsel %vm907, %v892, %v781
        %v910 = vsel %vm907, %v893, %v783
        %v911 = vsel %vm907, %v894, %v785
        %v912 = vsel %vm907, %v895, %v787
        %v913 = vsel %vm907, %v896, %v789
        %v914 = vsel %vm907, %v897, %v791
        %v915 = vsel %vm907, %v898, %v793
        %v916 = vsel %vm907, %v899, %v795
        %v917 = vsel %vm907, %v900, %v797
        %v918 = vsel %vm907, %v901, %v799
        %v919 = vsel %vm907, %v902, %v801
        %v920 = vsel %vm907, %v903, %v803
        %v921 = vsel %vm907, %v904, %v805
        %v922 = vsel %vm907, %v905, %v807
        %v923 = vsel %vm907, %v906, %v809
        %vm924 = vcmask 392192
        %v925 = vsel %vm924, %v908, %v843
        %v926 = vsel %vm924, %v909, %v845
        %v927 = vsel %vm924, %v910, %v847
        %v928 = vsel %vm924, %v911, %v849
        %v929 = vsel %vm924, %v912, %v851
        %v930 = vsel %vm924, %v913, %v853
        %v931 = vsel %vm924, %v914, %v855
        %v932 = vsel %vm924, %v915, %v857
        %v933 = vsel %vm924, %v916, %v859
        %v934 = vsel %vm924, %v917, %v861
        %v935 = vsel %vm924, %v918, %v863
        %v936 = vsel %vm924, %v919, %v865
        %v937 = vsel %vm924, %v920, %v867
        %v938 = vsel %vm924, %v921, %v869
        %v939 = vsel %vm924, %v922, %v871
        %v940 = vsel %vm924, %v923, %v873
        %vm941 = vcmask 516096
        %942 = vst.msk [vmem:[%s166] sm:$0x1] %vm941, %v925
        %943 = vst.msk [vmem:[%s166 + $0x1] sm:$0x1] %vm941, %v926
        %944 = vst.msk [vmem:[%s166 + $0x2] sm:$0x1] %vm941, %v927
        %945 = vst.msk [vmem:[%s166 + $0x3] sm:$0x1] %vm941, %v928
        %946 = vst.msk [vmem:[%s166 + $0x4] sm:$0x1] %vm941, %v929
        %947 = vst.msk [vmem:[%s166 + $0x5] sm:$0x1] %vm941, %v930
        %948 = vst.msk [vmem:[%s166 + $0x6] sm:$0x1] %vm941, %v931
        %949 = vst.msk [vmem:[%s166 + $0x7] sm:$0x1] %vm941, %v932
        %950 = vst.msk [vmem:[%s166 + $0x8] sm:$0x1] %vm941, %v933
        %951 = vst.msk [vmem:[%s166 + $0x9] sm:$0x1] %vm941, %v934
        %952 = vst.msk [vmem:[%s166 + $0xa] sm:$0x1] %vm941, %v935
        %953 = vst.msk [vmem:[%s166 + $0xb] sm:$0x1] %vm941, %v936
        %954 = vst.msk [vmem:[%s166 + $0xc] sm:$0x1] %vm941, %v937
        %955 = vst.msk [vmem:[%s166 + $0xd] sm:$0x1] %vm941, %v938
        %956 = vst.msk [vmem:[%s166 + $0xe] sm:$0x1] %vm941, %v939
        %957 = vst.msk [vmem:[%s166 + $0xf] sm:$0x1] %vm941, %v940
        %s958 = sand.u32 %s79, 1
        %s959 = scalar_lea.sflag [#allocation4], %s958
        %s960 = sand.u32 %s79, 1
        %s961 = smul.addr %s960, 16
        %s962 = scalar_lea.vmem [#allocation5], %s961
        // Predicated region
        $region29: #{tpu_custom_call.1} parent=23 // pred_check
          %p963 = pneg %p89
        $region30: #{tpu_custom_call.1} parent=23 // pred_check_branch
          %965 = sbr.rel (%p963) target = $region32
        $region31: #{tpu_custom_call.1} parent=23 // pred_region
          %s966 = smul.u32 16, %s25
          %s968 = ssub.s32 256, 256
          %969 = vsyncadd %s959, %s968
          %s970 = sadd.s32 %s24, %s966
          %s971 = smul.addr %s23, 16
          %s972 = sadd.s32 %s970, %s971
          %s973 = smul.addr %s972, 16
          %s974 = scalar_lea.hbm %s1, %s973
          %s975 = sshll.u32 %s962, 4
          %s976 = int_to_ptr.vmem [resolvable:$true] %s975
          %981 = dma.vmem_to_hbm [thread:$0]  %s976, 256, %s974, %s959, 16, 16, 1
        $region32: #{tpu_custom_call.1} parent=23 // pred_fallthru
          _
      $region24: #{tpu_custom_call.1} parent=5 // pred_fallthru
        _
      %p982 = scmp.le.s32.totalorder 2, %s13
      // Predicated region
      $region33: #{tpu_custom_call.1} parent=5 // pred_check
        %p983 = pneg %p982
      $region34: #{tpu_custom_call.1} parent=5 // pred_check_branch
        %985 = sbr.rel (%p983) target = $region36
      $region35: #{tpu_custom_call.1} parent=5 // pred_region
        %s986 = ssub.s32 %s13, 2
        // Predicated region
        $region37: #{tpu_custom_call.1} parent=35 // pred_check
          %p987 = pneg %p95
        $region38: #{tpu_custom_call.1} parent=35 // pred_check_branch
          %989 = sbr.rel (%p987) target = $region40
        $region39: #{tpu_custom_call.1} parent=35 // pred_region
          %s990 = sand.u32 %s80, 1
          %s991 = scalar_lea.sflag [#allocation4], %s990
          %s992 = sand.u32 %s80, 1
          %s993 = smul.addr %s992, 16
          %s994 = scalar_lea.vmem [#allocation5], %s993
          %995 = dma.done %s991, 256
        $region40: #{tpu_custom_call.1} parent=35 // pred_fallthru
          _
      $region36: #{tpu_custom_call.1} parent=5 // pred_fallthru
        _
    $region6: #{tpu_custom_call.1} parent=1 // loop_footer
      %s17 = sadd.s32 1, %s13
    $region7: #{tpu_custom_call.1} parent=1 // loop_footer_branch
      %12 = sbr.rel target = $region3
    $region8: #{tpu_custom_call.1} parent=1 // loop_exit
      _
    %996 = vsyncpa [#allocation3], 1
    %s997 = scalar_lea.sflag [#allocation3], 1
    %998 = vsyncpa %s997, 1
    %999 = vsyncpa [#allocation4], 1
    %s1000 = scalar_lea.sflag [#allocation4], 1
    %1001 = vsyncpa %s1000, 1

// kernel: tpu_custom_call.1
$region0: #{tpu_custom_call.1}
  #allocation0 [shape = 'u32[]', space=smem, size = 0x4, offset = 0x4, fixed_abs, tag = 'smem constant byte address 0x4 - core index']
  #allocation1 [shape = 'u32[144,128]{1,0:T(1,128)}', space=vmem, size = 0x12000, scoped, tag = 'internal scratch']
  %s0 = inlined_call_operand.hbm [shape: f32[2,4,1,16,16], index: 0, kind: input, shape index: {}]
  %s1 = inlined_call_operand.hbm [shape: f32[2,16,1,4,16], index: 1, kind: output, shape index: {}]
  %s2 = sld [smem:[#allocation0]]
  $region41: #{tpu_custom_call.1} parent=0
    _
  %s4 = ssub.s32 1, %s2
  %s5 = scalar_select 0, %s4, %s2
  $region1: #{tpu_custom_call.1} parent=0
    #allocation2 [shape = 'u8[65536]{0}', space=vmem, size = 0x10000, scoped, tag = 'input window, operand 0']
    #allocation3 [shape = 's32[2]{0}', space=sflag, size = 0x8, scoped, tag = 'scoped memory for tpu_custom_call.1']
    #allocation4 [shape = 's32[2]{0}', space=sflag, size = 0x8, scoped, tag = 'scoped memory for tpu_custom_call.1']
    #allocation5 [shape = 'u8[65536]{0}', space=vmem, size = 0x10000, scoped, tag = 'output window, operand 0']
    %6 = vsyncpa [#allocation3], 0
    %s7 = scalar_lea.sflag [#allocation3], 1
    %8 = vsyncpa %s7, 0
    %9 = vsyncpa [#allocation4], 0
    %s10 = scalar_lea.sflag [#allocation4], 1
    %11 = vsyncpa %s10, 0
    loop: start=0, step=1, limit=4
    $region2: #{tpu_custom_call.1} parent=1 // loop_pre_header
      _
    $region3: #{tpu_custom_call.1} parent=1 // loop_header
      %s13 = sphi 0, %s17
      %p14 = scmp.ge.s32.totalorder %s13, 4
      %s20 = sphi 0, %s39
      %s21 = sphi 0, %s35
      %s22 = sphi 0, %s31
      %s23 = sphi 0, %s20
      %s24 = sphi 0, %s21
      %s25 = sphi 0, %s22
      %s26 = sphi 0, %s23
      %s27 = sphi 0, %s24
      %s28 = sphi 0, %s25
      %s46 = sphi 0, %s48
      %s49 = sphi 0, %s46
      %s50 = sphi 0, %s49
      %s66 = sphi 0, %s50
      %s76 = sphi 0, %s78
      %s79 = sphi 0, %s76
      %s80 = sphi 0, %s79
      %s96 = sphi 0, %s80
    $region4: #{tpu_custom_call.1} parent=1 // loop_header_branch
      %16 = sbr.rel (%p14) target = $region8
    $region5: #{tpu_custom_call.1} parent=1 // loop_body
      %s18 = ssub.s32 %s13, 1
      %s19 = ssub.s32 %s13, 2
      %s29 = sadd.s32 1, %s22
      %p30 = scmp.ge.s32.totalorder %s29, 1
      %s31 = scalar_select %p30, 0, %s29
      %s32 = sadd.s32 1, %s21
      %s33 = scalar_select %p30, %s32, %s21
      %p34 = scmp.ge.s32.totalorder %s33, 1
      %s35 = scalar_select %p34, 0, %s33
      %s36 = sadd.s32 1, %s20
      %s37 = scalar_select %p34, %s36, %s20
      %p38 = scmp.ge.s32.totalorder %s37, 2
      %s39 = scalar_select %p38, 0, %s37
      %s40 = ssub.s32 %s20, %s39
      %s41 = ssub.s32 %s21, %s35
      %s42 = sor.u32 %s40, %s41
      %s43 = ssub.s32 %s22, %s31
      %s44 = sor.u32 %s42, %s43
      %p45 = scmp.eq.s32.totalorder %s44, 0
      %s47 = sadd.s32 %s46, 1
      %s48 = scalar_select %p45, %s46, %s47
      %p51 = pneg %p45
      %p52 = scmp.eq.s32.totalorder %s13, 1
      %p53 = por %p51, %p52
      %p54 = scmp.ne.s32.totalorder %s46, %s49
      %p55 = scmp.eq.s32.totalorder %s13, 0
      %p56 = por %p54, %p55
      %p57 = scmp.ne.s32.totalorder %s46, %s49
      %p58 = scmp.eq.s32.totalorder %s18, 1
      %p59 = por %p57, %p58
      %p60 = scmp.ne.s32.totalorder %s49, %s50
      %p61 = scmp.eq.s32.totalorder %s18, 0
      %p62 = por %p60, %p61
      %p63 = scmp.ne.s32.totalorder %s49, %s50
      %p64 = scmp.eq.s32.totalorder %s19, 1
      %p65 = por %p63, %p64
      %p67 = scmp.ne.s32.totalorder %s50, %s66
      %p68 = scmp.eq.s32.totalorder %s19, 0
      %p69 = por %p67, %p68
      %s70 = ssub.s32 %s20, %s39
      %s71 = ssub.s32 %s22, %s31
      %s72 = sor.u32 %s70, %s71
      %s73 = ssub.s32 %s21, %s35
      %s74 = sor.u32 %s72, %s73
      %p75 = scmp.eq.s32.totalorder %s74, 0
      %s77 = sadd.s32 %s76, 1
      %s78 = scalar_select %p75, %s76, %s77
      %p81 = pneg %p75
      %p82 = scmp.eq.s32.totalorder %s13, 1
      %p83 = por %p81, %p82
      %p84 = scmp.ne.s32.totalorder %s76, %s79
      %p85 = scmp.eq.s32.totalorder %s13, 0
      %p86 = por %p84, %p85
      %p87 = scmp.ne.s32.totalorder %s76, %s79
      %p88 = scmp.eq.s32.totalorder %s18, 1
      %p89 = por %p87, %p88
      %p90 = scmp.ne.s32.totalorder %s79, %s80
      %p91 = scmp.eq.s32.totalorder %s18, 0
      %p92 = por %p90, %p91
      %p93 = scmp.ne.s32.totalorder %s79, %s80
      %p94 = scmp.eq.s32.totalorder %s19, 1
      %p95 = por %p93, %p94
      %p97 = scmp.ne.s32.totalorder %s80, %s96
      %p98 = scmp.eq.s32.totalorder %s19, 0
      %p99 = por %p97, %p98
      %p100 = scmp.le.s32.totalorder 1, %s13
      %p101 = scmp.lt.s32.totalorder %s13, 3
      %p102 = pnand %p100, %p101
      %p103 = pneg %p102
      // Predicated region
      $region9: #{tpu_custom_call.1} parent=5 // pred_check
        _
      $region10: #{tpu_custom_call.1} parent=5 // pred_check_branch
        %105 = sbr.rel (%p102) target = $region12
      $region11: #{tpu_custom_call.1} parent=5 // pred_region
        %s106 = ssub.s32 %s13, 1
      $region12: #{tpu_custom_call.1} parent=5 // pred_fallthru
        _
      %p107 = scmp.lt.s32.totalorder %s13, 2
      // Predicated region
      $region13: #{tpu_custom_call.1} parent=5 // pred_check
        %p108 = pneg %p107
      $region14: #{tpu_custom_call.1} parent=5 // pred_check_branch
        %110 = sbr.rel (%p108) target = $region16
      $region15: #{tpu_custom_call.1} parent=5 // pred_region
        // Predicated region
        $region17: #{tpu_custom_call.1} parent=15 // pred_check
          %p111 = pneg %p56
        $region18: #{tpu_custom_call.1} parent=15 // pred_check_branch
          %113 = sbr.rel (%p111) target = $region20
        $region19: #{tpu_custom_call.1} parent=15 // pred_region
          %s114 = sand.u32 %s46, 1
          %s115 = scalar_lea.sflag [#allocation3], %s114
          %s116 = sand.u32 %s46, 1
          %s117 = smul.addr %s116, 64
          %s118 = scalar_lea.vmem [#allocation2], %s117
          %s119 = smul.u32 4, %s21
          %s120 = smul.u32 2, %s22
          %s122 = ssub.s32 1024, 1024
          %123 = vsyncadd %s115, %s122
          %s124 = smul.addr %s119, 2
          %s125 = sadd.s32 %s120, %s124
          %s126 = smul.addr %s20, 8
          %s127 = sadd.s32 %s125, %s126
          %s128 = smul.addr %s127, 128
          %s129 = scalar_lea.hbm %s0, %s128
          %s130 = sshll.u32 %s118, 4
          %s131 = int_to_ptr.vmem [resolvable:$true] %s130
          %136 = dma.hbm_to_vmem [thread:$0]  %s129, 1024, %s131, %s115, 128, 128, 8
        $region20: #{tpu_custom_call.1} parent=15 // pred_fallthru
          _
      $region16: #{tpu_custom_call.1} parent=5 // pred_fallthru
        _
      %p137 = scmp.le.s32.totalorder 1, %s13
      %p138 = scmp.lt.s32.totalorder %s13, 3
      %p139 = pnand %p137, %p138
      %p140 = pneg %p139
      // Predicated region
      $region21: #{tpu_custom_call.1} parent=5 // pred_check
        _
      $region22: #{tpu_custom_call.1} parent=5 // pred_check_branch
        %142 = sbr.rel (%p139) target = $region24
      $region23: #{tpu_custom_call.1} parent=5 // pred_region
        %s143 = ssub.s32 %s13, 1
        %s144 = sand.u32 %s49, 1
        %s145 = scalar_lea.sflag [#allocation3], %s144
        %s146 = sand.u32 %s49, 1
        %s147 = smul.addr %s146, 64
        %s148 = scalar_lea.vmem [#allocation2], %s147
        // Predicated region
        $region25: #{tpu_custom_call.1} parent=23 // pred_check
          %p149 = pneg %p62
        $region26: #{tpu_custom_call.1} parent=23 // pred_check_branch
          %151 = sbr.rel (%p149) target = $region28
        $region27: #{tpu_custom_call.1} parent=23 // pred_region
          %152 = dma.done %s145, 1024
        $region28: #{tpu_custom_call.1} parent=23 // pred_fallthru
          _
        %s153 = sand.u32 %s49, 1
        %s154 = scalar_lea.sflag [#allocation3], %s153
        %s155 = sand.u32 %s49, 1
        %s156 = smul.addr %s155, 64
        %s157 = scalar_lea.vmem [#allocation2], %s156
        %p158 = pneg %p62
        %p159 = pneg %p59
        %p160 = pneg %p92
        %p161 = pneg %p89
        %s162 = sand.u32 %s79, 1
        %s163 = scalar_lea.sflag [#allocation4], %s162
        %s164 = sand.u32 %s79, 1
        %s165 = smul.addr %s164, 64
        %s166 = scalar_lea.vmem [#allocation5], %s165
        %s167 = smul.u32 4, %s24
        %s168 = smul.u32 2, %s25
        %s169 = smul.u32 16, %s25
        %v170 = vld [vmem:[%s148] sm:$0xff]
        %v171 = vld [vmem:[%s148 + $0x8] sm:$0xff]
        %v172 = vld [vmem:[%s148 + $0x10] sm:$0xff]
        %v173 = vld [vmem:[%s148 + $0x18] sm:$0xff]
        %v174 = vld [vmem:[%s148 + $0x20] sm:$0xff]
        %v175 = vld [vmem:[%s148 + $0x28] sm:$0xff]
        %v176 = vld [vmem:[%s148 + $0x30] sm:$0xff]
        %v177 = vld [vmem:[%s148 + $0x38] sm:$0xff]
        %v178 = vcombine.low %v170, %v174
        %v179 = vcombine.high %v170, %v174
        %v181 = vunpack.c.l.s4 1983009808
        %v182 = vunpack.c.0.s8 %v181
        %v183 = vlaneseq
        %v184 = vshrl.u32 %v183, 7
        %v185 = vsub.s32 %v182, %v184
        %v186 = vrot.slane %v178, %v185
        %v188 = vunpack.c.l.s4 1983009808
        %v189 = vunpack.c.0.s8 %v188
        %v190 = vlaneseq
        %v191 = vshrl.u32 %v190, 7
        %v192 = vsub.s32 %v189, %v191
        %v193 = vrot.slane %v179, %v192
        %v194 = vcombine.low %v172, %v176
        %v195 = vcombine.high %v172, %v176
        %v197 = vunpack.c.l.s4 1983009808
        %v198 = vunpack.c.0.s8 %v197
        %v199 = vlaneseq
        %v200 = vshrl.u32 %v199, 7
        %v201 = vsub.s32 %v198, %v200
        %v202 = vrot.slane %v194, %v201
        %v204 = vunpack.c.l.s4 1983009808
        %v205 = vunpack.c.0.s8 %v204
        %v206 = vlaneseq
        %v207 = vshrl.u32 %v206, 7
        %v208 = vsub.s32 %v205, %v207
        %v209 = vrot.slane %v195, %v208
        %v210 = vcombine.low %v186, %v202
        %v211 = vcombine.high %v186, %v202
        %v213 = vunpack.c.l.s4 1934713408
        %v214 = vunpack.c.0.s8 %v213
        %v215 = vlaneseq
        %v216 = vshrl.u32 %v215, 7
        %v217 = vsub.s32 %v214, %v216
        %v218 = vrot.slane %v210, %v217
        %v220 = vunpack.c.l.s4 1934713408
        %v221 = vunpack.c.0.s8 %v220
        %v222 = vlaneseq
        %v223 = vshrl.u32 %v222, 7
        %v224 = vsub.s32 %v221, %v223
        %v225 = vrot.slane %v211, %v224
        %v226 = vcombine.low %v193, %v209
        %v227 = vcombine.high %v193, %v209
        %v229 = vunpack.c.l.s4 1934713408
        %v230 = vunpack.c.0.s8 %v229
        %v231 = vlaneseq
        %v232 = vshrl.u32 %v231, 7
        %v233 = vsub.s32 %v230, %v232
        %v234 = vrot.slane %v226, %v233
        %v236 = vunpack.c.l.s4 1934713408
        %v237 = vunpack.c.0.s8 %v236
        %v238 = vlaneseq
        %v239 = vshrl.u32 %v238, 7
        %v240 = vsub.s32 %v237, %v239
        %v241 = vrot.slane %v227, %v240
        %v242 = vcombine.high %v218, 0.0
        %v243 = vcombine.high %v225, 0.0
        %v244 = vcombine.high %v234, 0.0
        %v245 = vcombine.high %v241, 0.0
        %v246 = vcombine.low %v171, %v175
        %v247 = vcombine.high %v171, %v175
        %v249 = vunpack.c.l.s4 1983009808
        %v250 = vunpack.c.0.s8 %v249
        %v251 = vlaneseq
        %v252 = vshrl.u32 %v251, 7
        %v253 = vsub.s32 %v250, %v252
        %v254 = vrot.slane %v246, %v253
        %v256 = vunpack.c.l.s4 1983009808
        %v257 = vunpack.c.0.s8 %v256
        %v258 = vlaneseq
        %v259 = vshrl.u32 %v258, 7
        %v260 = vsub.s32 %v257, %v259
        %v261 = vrot.slane %v247, %v260
        %v262 = vcombine.low %v173, %v177
        %v263 = vcombine.high %v173, %v177
        %v265 = vunpack.c.l.s4 1983009808
        %v266 = vunpack.c.0.s8 %v265
        %v267 = vlaneseq
        %v268 = vshrl.u32 %v267, 7
        %v269 = vsub.s32 %v266, %v268
        %v270 = vrot.slane %v262, %v269
        %v272 = vunpack.c.l.s4 1983009808
        %v273 = vunpack.c.0.s8 %v272
        %v274 = vlaneseq
        %v275 = vshrl.u32 %v274, 7
        %v276 = vsub.s32 %v273, %v275
        %v277 = vrot.slane %v263, %v276
        %v278 = vcombine.low %v254, %v270
        %v279 = vcombine.high %v254, %v270
        %v281 = vunpack.c.l.s4 1934713408
        %v282 = vunpack.c.0.s8 %v281
        %v283 = vlaneseq
        %v284 = vshrl.u32 %v283, 7
        %v285 = vsub.s32 %v282, %v284
        %v286 = vrot.slane %v278, %v285
        %v288 = vunpack.c.l.s4 1934713408
        %v289 = vunpack.c.0.s8 %v288
        %v290 = vlaneseq
        %v291 = vshrl.u32 %v290, 7
        %v292 = vsub.s32 %v289, %v291
        %v293 = vrot.slane %v279, %v292
        %v294 = vcombine.low %v261, %v277
        %v295 = vcombine.high %v261, %v277
        %v297 = vunpack.c.l.s4 1934713408
        %v298 = vunpack.c.0.s8 %v297
        %v299 = vlaneseq
        %v300 = vshrl.u32 %v299, 7
        %v301 = vsub.s32 %v298, %v300
        %v302 = vrot.slane %v294, %v301
        %v304 = vunpack.c.l.s4 1934713408
        %v305 = vunpack.c.0.s8 %v304
        %v306 = vlaneseq
        %v307 = vshrl.u32 %v306, 7
        %v308 = vsub.s32 %v305, %v307
        %v309 = vrot.slane %v295, %v308
        %v310 = vcombine.high %v286, 0.0
        %v311 = vcombine.high %v293, 0.0
        %v312 = vcombine.high %v302, 0.0
        %v313 = vcombine.high %v309, 0.0
        %vm314 = vcmask 125952
        %315 = vst.msk [vmem:[%s166] sm:$0xf] %vm314, %v218
        %316 = vst.msk [vmem:[%s166 + $0x4] sm:$0xf] %vm314, %v242
        %317 = vst.msk [vmem:[%s166 + $0x8] sm:$0xf] %vm314, %v225
        %318 = vst.msk [vmem:[%s166 + $0xc] sm:$0xf] %vm314, %v243
        %319 = vst.msk [vmem:[%s166 + $0x10] sm:$0xf] %vm314, %v234
        %320 = vst.msk [vmem:[%s166 + $0x14] sm:$0xf] %vm314, %v244
        %321 = vst.msk [vmem:[%s166 + $0x18] sm:$0xf] %vm314, %v241
        %322 = vst.msk [vmem:[%s166 + $0x1c] sm:$0xf] %vm314, %v245
        %323 = vst.msk [vmem:[%s166 + $0x20] sm:$0xf] %vm314, %v286
        %324 = vst.msk [vmem:[%s166 + $0x24] sm:$0xf] %vm314, %v310
        %325 = vst.msk [vmem:[%s166 + $0x28] sm:$0xf] %vm314, %v293
        %326 = vst.msk [vmem:[%s166 + $0x2c] sm:$0xf] %vm314, %v311
        %327 = vst.msk [vmem:[%s166 + $0x30] sm:$0xf] %vm314, %v302
        %328 = vst.msk [vmem:[%s166 + $0x34] sm:$0xf] %vm314, %v312
        %329 = vst.msk [vmem:[%s166 + $0x38] sm:$0xf] %vm314, %v309
        %330 = vst.msk [vmem:[%s166 + $0x3c] sm:$0xf] %vm314, %v313
        %s331 = sand.u32 %s79, 1
        %s332 = scalar_lea.sflag [#allocation4], %s331
        %s333 = sand.u32 %s79, 1
        %s334 = smul.addr %s333, 64
        %s335 = scalar_lea.vmem [#allocation5], %s334
        // Predicated region
        $region29: #{tpu_custom_call.1} parent=23 // pred_check
          %p336 = pneg %p89
        $region30: #{tpu_custom_call.1} parent=23 // pred_check_branch
          %338 = sbr.rel (%p336) target = $region32
        $region31: #{tpu_custom_call.1} parent=23 // pred_region
          %s339 = smul.u32 16, %s25
          %s341 = ssub.s32 1024, 1024
          %342 = vsyncadd %s332, %s341
          %s343 = sadd.s32 %s24, %s339
          %s344 = smul.addr %s23, 16
          %s345 = sadd.s32 %s343, %s344
          %s346 = smul.addr %s345, 64
          %s347 = scalar_lea.hbm %s1, %s346
          %s348 = sshll.u32 %s335, 4
          %s349 = int_to_ptr.vmem [resolvable:$true] %s348
          %354 = dma.vmem_to_hbm [thread:$0]  %s349, 1024, %s347, %s332, 64, 64, 4
        $region32: #{tpu_custom_call.1} parent=23 // pred_fallthru
          _
      $region24: #{tpu_custom_call.1} parent=5 // pred_fallthru
        _
      %p355 = scmp.le.s32.totalorder 2, %s13
      // Predicated region
      $region33: #{tpu_custom_call.1} parent=5 // pred_check
        %p356 = pneg %p355
      $region34: #{tpu_custom_call.1} parent=5 // pred_check_branch
        %358 = sbr.rel (%p356) target = $region36
      $region35: #{tpu_custom_call.1} parent=5 // pred_region
        %s359 = ssub.s32 %s13, 2
        // Predicated region
        $region37: #{tpu_custom_call.1} parent=35 // pred_check
          %p360 = pneg %p95
        $region38: #{tpu_custom_call.1} parent=35 // pred_check_branch
          %362 = sbr.rel (%p360) target = $region40
        $region39: #{tpu_custom_call.1} parent=35 // pred_region
          %s363 = sand.u32 %s80, 1
          %s364 = scalar_lea.sflag [#allocation4], %s363
          %s365 = sand.u32 %s80, 1
          %s366 = smul.addr %s365, 64
          %s367 = scalar_lea.vmem [#allocation5], %s366
          %368 = dma.done %s364, 1024
        $region40: #{tpu_custom_call.1} parent=35 // pred_fallthru
          _
      $region36: #{tpu_custom_call.1} parent=5 // pred_fallthru
        _
    $region6: #{tpu_custom_call.1} parent=1 // loop_footer
      %s17 = sadd.s32 1, %s13
    $region7: #{tpu_custom_call.1} parent=1 // loop_footer_branch
      %12 = sbr.rel target = $region3
    $region8: #{tpu_custom_call.1} parent=1 // loop_exit
      _
    %369 = vsyncpa [#allocation3], 1
    %s370 = scalar_lea.sflag [#allocation3], 1
    %371 = vsyncpa %s370, 1
    %372 = vsyncpa [#allocation4], 1
    %s373 = scalar_lea.sflag [#allocation4], 1
    %374 = vsyncpa %s373, 1

</llo_original>
